<compile_context>
chip_gen: v7x
topology: tpu7x:2x2x1
jax: 0.10.0
libtpu: 0.0.40
codegen_flags: <defaults>
</compile_context>

<pallas_src>
import jax
import jax.numpy as jnp
from jax.experimental import pallas as pl
from jax.experimental.pallas import tpu as pltpu


def _spectral_normalize(w2d: jax.Array, n_iters: int = 30) -> jax.Array:
    """Eval-time spectral norm (power iteration), mirrors torch spectral_norm.

    Weight preprocessing (glue), not part of the kernel hot path.
    """
    out_dim, _ = w2d.shape
    u0 = jnp.ones((out_dim,), jnp.float32) / jnp.sqrt(out_dim)

    def body(_, u):
        v = w2d.T @ u
        v = v / (jnp.linalg.norm(v) + 1e-12)
        u = w2d @ v
        u = u / (jnp.linalg.norm(u) + 1e-12)
        return u

    u = jax.lax.fori_loop(0, n_iters, body, u0)
    v = w2d.T @ u
    v = v / (jnp.linalg.norm(v) + 1e-12)
    sigma = u @ (w2d @ v)
    return w2d / sigma


def _self_attn_kernel(x_ref, w_ref, gamma_ref, o_ref, f_sc, g_sc, h_sc):
    """Grid = (batch, column-tile of the attention matrix).

    x_ref:     (1, C, N)          f32, resident for the whole batch element
    w_ref:     (2*cq_pad + C, C)  bf16 fused [Wq_pad ; Wk_pad ; Wv]
    gamma_ref: (1,)               f32 scalar in SMEM
    o_ref:     (1, C, TN)         f32 output tile
    f_sc:      (cq_pad, N)        f32 scratch, query activations
    g_sc:      (cq_pad, N)        f32 scratch, key activations
    h_sc:      (C + 8, N)         bf16 scratch, value activations + ones row
    """
    col = pl.program_id(1)
    cq_pad = f_sc.shape[0]
    c = o_ref.shape[1]
    tn = o_ref.shape[2]
    n = x_ref.shape[2]

    # ---- once per batch element: fused Q/K/V projection, resident in VMEM ----
    @pl.when(col == 0)
    def _():
        # Chunk over N so the f32 projection intermediate never exceeds
        # (2*cq_pad + C, TN) (avoids a one-shot VMEM spike on v7x).
        for j in range(n // tn):
            sl = pl.ds(j * tn, tn)
            xb = x_ref[0, :, sl].astype(jnp.bfloat16)                 # (C, TN)
            pr = jnp.dot(w_ref[...], xb, preferred_element_type=jnp.float32)
            pr = jnp.maximum(pr, 0.0)                                 # fused ReLU
            f_sc[:, sl] = pr[:cq_pad, :]
            g_sc[:, sl] = pr[cq_pad:2 * cq_pad, :]
            h_sc[:c, sl] = pr[2 * cq_pad:, :].astype(jnp.bfloat16)
        # Row c of h_sc is all ones so the h @ p matmul also yields the
        # softmax column sum; rows c+1 .. c+7 are zero padding.
        ridx = jax.lax.broadcasted_iota(jnp.int32, (8, n), 0)
        h_sc[c:, :] = jnp.where(ridx == 0, 1.0, 0.0).astype(jnp.bfloat16)

    # ---- per column tile of the attention matrix -----------------------------
    start = pl.multiple_of(col * tn, tn)

    # s = f^T @ g_tile -> (N, TN): contract axis 0 of both operands; K = cq_pad
    # is tiny so the f32 MXU cost is noise and no transposed f copy is needed.
    g_tile = g_sc[:, pl.ds(start, tn)]
    s = jax.lax.dot_general(f_sc[...], g_tile, (((0,), (0,)), ((), ())),
                            preferred_element_type=jnp.float32)      # (N, TN)

    # Softmax over axis 0 (== torch dim=1), normalization deferred past the MXU.
    m = jnp.max(s, axis=0, keepdims=True)                            # (1, TN)
    p = jnp.exp(s - m).astype(jnp.bfloat16)                          # (N, TN)

    # [h ; ones] @ p: rows [0, C) are the attended values, row C is colsum.
    hp = jnp.dot(h_sc[...], p, preferred_element_type=jnp.float32)   # (C+8, TN)
    att = hp[:c, :]                                                  # (C, TN)
    colsum = hp[c:c + 1, :]                                          # (1, TN), >= 1

    # o = gamma * (h @ p) / colsum + x   (exact when gamma == 0)
    scale = gamma_ref[0] * pl.reciprocal(colsum, approx=True)
    x_tile = x_ref[0, :, pl.ds(start, tn)]                           # (C, TN) f32
    o_ref[0] = (att * scale + x_tile).astype(o_ref.dtype)


def _vmem_limit_bytes() -> int:
    """Scoped-VMEM limit with headroom (v7x has only 64 MiB physical/core)."""
    try:
        cap = int(pltpu.get_tpu_info().vmem_capacity_bytes)
    except Exception:
        cap = 0
    if cap < 32 * 1024 * 1024:
        cap = 64 * 1024 * 1024          # conservative fallback: assume v7x
    return min(cap - 16 * 1024 * 1024, 100 * 1024 * 1024)


def _pick_col_tile(n: int, c: int, vmem_budget: int) -> int:
    """Largest lane-dense column tile that divides N and fits the VMEM budget."""
    if n <= 512:
        return n
    divisors = [t for t in (1024, 512, 256, 128) if n % t == 0]
    if not divisors:
        return n
    # resident: x (f32, double-buffered) + f/g (f32) + h (bf16) scratch
    resident = 2 * c * n * 4 + 2 * 8 * n * 4 + (c + 8) * n * 2
    for t in divisors:
        # per tile: f32 score slab + bf16 p slab + double-buffered output tile
        per_tile = n * t * (4 + 2) + 2 * c * t * 4
        if resident + per_tile <= vmem_budget:
            return t
    return divisors[-1]


@jax.jit
def m3_self_attention_feature_extractor(x, wq, wk, wv, gamma):
    """x: (B, C, H, W) f32; wq/wk: (C//8, C); wv: (C, C); gamma: (1,).

    Returns (B, C*H*W), matching M3SelfAttentionFeatureExtractor.forward
    (with spectrally-normalized conv weights passed in).
    """
    B, C, H, W = x.shape
    N = H * W
    Cq = wq.shape[0]

    # Pad the tiny query/key output channels up to a sublane multiple of 8.
    # Zero rows give ReLU(0) = 0 activations that contribute exactly 0 to f^T g.
    cq_pad = max(8, -(-Cq // 8) * 8)
    pad = cq_pad - Cq
    wq_p = jnp.pad(wq.astype(jnp.float32), ((0, pad), (0, 0)))
    wk_p = jnp.pad(wk.astype(jnp.float32), ((0, pad), (0, 0)))

    # One fused projection weight: a single MXU pass yields f, g and h.
    w_fgh = jnp.concatenate([wq_p, wk_p, wv.astype(jnp.float32)],
                            axis=0).astype(jnp.bfloat16)   # (2*cq_pad + C, C)

    x3 = x.reshape(B, C, N).astype(jnp.float32)
    gamma1 = jnp.reshape(gamma, (1,)).astype(jnp.float32)

    vmem_limit = _vmem_limit_bytes()
    tn = _pick_col_tile(N, C, vmem_limit - 8 * 1024 * 1024)
    num_col = N // tn

    out = pl.pallas_call(
        _self_attn_kernel,
        out_shape=jax.ShapeDtypeStruct((B, C, N), jnp.float32),
        grid=(B, num_col),
        in_specs=[
            # x: resident for the whole batch element (projection + residual).
            pl.BlockSpec((1, C, N), lambda b, c: (b, 0, 0)),
            # Fused weight never changes across the grid -> single buffer.
            pl.BlockSpec((2 * cq_pad + C, C), lambda b, c: (0, 0),
                         pipeline_mode=pl.Buffered(1)),
            # gamma scalar in SMEM (free scalar read).
            pl.BlockSpec(memory_space=pltpu.MemorySpace.SMEM),
        ],
        out_specs=pl.BlockSpec((1, C, tn), lambda b, c: (b, 0, c)),
        scratch_shapes=[
            pltpu.VMEM((cq_pad, N), jnp.float32),       # f (query)
            pltpu.VMEM((cq_pad, N), jnp.float32),       # g (key)
            pltpu.VMEM((C + 8, N), jnp.bfloat16),       # h (value) + ones row
        ],
        compiler_params=pltpu.CompilerParams(
            # Batch axis "parallel" (needs B >= 2 to feed both v7x cores).
            # The col axis MUST stay "arbitrary": the projections written at
            # col == 0 live in per-core scratch and are reused across tiles.
            dimension_semantics=("parallel", "arbitrary"),
            vmem_limit_bytes=vmem_limit),
    )(x3, w_fgh, gamma1)

    return out.reshape(B, C * N).astype(x.dtype)


def _reference(x, wq, wk, wv, gamma):
    """Pure-JAX reference of the PyTorch forward (for a correctness check)."""
    B, C, H, W = x.shape
    N = H * W
    xr = x.reshape(B, C, N)
    f = jax.nn.relu(jnp.einsum("oc,bcn->bon", wq, xr))
    g = jax.nn.relu(jnp.einsum("oc,bcn->bon", wk, xr))
    h = jax.nn.relu(jnp.einsum("oc,bcn->bon", wv, xr))
    s = jnp.einsum("bki,bkj->bij", f, g)
    beta = jax.nn.softmax(s, axis=1)
    o = gamma[0] * jnp.einsum("bcn,bnj->bcj", h, beta) + xr
    return o.reshape(B, C * N)


if __name__ == "__main__":
    # Shapes implied by the module: C must be >= 8 so that C // 8 >= 1.
    # B = 2 also keeps both v7x TensorCores busy on the "parallel" batch axis.
    B, C, H, W = 2, 32, 16, 16
    Cq = C // 8

    key = jax.random.PRNGKey(0)
    kx, kq, kk, kv = jax.random.split(key, 4)

    x = jax.random.normal(kx, (B, C, H, W), dtype=jnp.float32)
    wq = _spectral_normalize(jax.random.uniform(kq, (Cq, C), jnp.float32, -0.1, 0.1))
    wk = _spectral_normalize(jax.random.uniform(kk, (Cq, C), jnp.float32, -0.1, 0.1))
    wv = _spectral_normalize(jax.random.uniform(kv, (C, C), jnp.float32, -0.1, 0.1))

    # Module init: gamma = 0.0 -> output == flattened input (exact path).
    gamma0 = jnp.array([0.0], dtype=jnp.float32)
    out0 = m3_self_attention_feature_extractor(x, wq, wk, wv, gamma0)
    jax.block_until_ready(out0)
    assert out0.shape == (B, C * H * W), out0.shape
    assert bool(jnp.allclose(out0, x.reshape(B, -1), atol=1e-6)), "gamma=0 path mismatch"

    # Non-trivial gamma: compare against the pure-JAX reference (bf16 MXU
    # operands for the projections / h@p inside the kernel -> loose tolerance).
    gamma1 = jnp.array([0.75], dtype=jnp.float32)
    out1 = m3_self_attention_feature_extractor(x, wq, wk, wv, gamma1)
    ref1 = _reference(x, wq, wk, wv, gamma1)
    jax.block_until_ready(out1)
    jax.block_until_ready(ref1)
    assert bool(jnp.allclose(out1, ref1, atol=5e-2, rtol=5e-2)), (
        "max abs err = " + str(float(jnp.max(jnp.abs(out1 - ref1)))))

    print("KERNEL_OK")
</pallas_src>

<mosaic_0001>
module attributes {stable_mosaic.version = 11 : i64} {
  func.func @_self_attn_kernel(%arg0: i32, %arg1: i32, %arg2: memref<1x32x256xf32, #tpu.memory_space<vmem>>, %arg3: memref<48x32xbf16, #tpu.memory_space<vmem>>, %arg4: memref<1xf32, #tpu.memory_space<smem>>, %arg5: memref<1x32x256xf32, #tpu.memory_space<vmem>>, %arg6: memref<8x256xf32, #tpu.memory_space<vmem>>, %arg7: memref<8x256xf32, #tpu.memory_space<vmem>>, %arg8: memref<40x256xbf16, #tpu.memory_space<vmem>>) attributes {dimension_semantics = [#tpu.dimension_semantics<parallel>, #tpu.dimension_semantics<arbitrary>], iteration_bounds = array<i64: 2, 1>, scalar_prefetch = 0 : i64, scratch_operands = 3 : i64, tpu.core_type = #tpu.core_type<tc>, window_params = [{transform_indices = @transform_0, window_bounds = array<i64: 1, 32, 256>}, {pipeline_mode = #tpu.pipeline_mode<synchronous>, transform_indices = @transform_1, window_bounds = array<i64: 48, 32>}, {transform_indices = @transform_2, window_bounds = array<i64: 1>}, {transform_indices = @transform_3, window_bounds = array<i64: 1, 32, 256>}]} {
    %c0_i32 = arith.constant 0 : i32
    %0 = arith.cmpi eq, %arg1, %c0_i32 : i32
    %1 = arith.extui %0 : i1 to i32
    %c0_i32_0 = arith.constant 0 : i32
    %2 = arith.cmpi ne, %1, %c0_i32_0 : i32
    scf.if %2 {
      %c0_13 = arith.constant 0 : index
      %c0_14 = arith.constant 0 : index
      %c0_15 = arith.constant 0 : index
      %32 = vector.load %arg2[%c0_13, %c0_14, %c0_15] : memref<1x32x256xf32, #tpu.memory_space<vmem>>, vector<1x32x256xf32>
      %33 = vector.shape_cast %32 : vector<1x32x256xf32> to vector<32x256xf32>
      %34 = arith.truncf %33 : vector<32x256xf32> to vector<32x256xbf16>
      %c0_16 = arith.constant 0 : index
      %c0_17 = arith.constant 0 : index
      %35 = vector.load %arg3[%c0_16, %c0_17] : memref<48x32xbf16, #tpu.memory_space<vmem>>, vector<48x32xbf16>
      %cst_18 = arith.constant dense<0.000000e+00> : vector<48x256xf32>
      %36 = tpu.matmul %35, %34, %cst_18 {dimension_numbers = #tpu.dot_dimension_numbers<[1], [0], [0], [1], [0, 0, 1, 1], [], []>} : vector<48x32xbf16>, vector<32x256xbf16>, vector<48x256xf32> -> vector<48x256xf32>
      %cst_19 = arith.constant 0.000000e+00 : f32
      %37 = vector.broadcast %cst_19 : f32 to vector<48x256xf32>
      %38 = arith.maximumf %36, %37 : vector<48x256xf32>
      %39 = vector.extract_strided_slice %38 {offsets = [0, 0], sizes = [8, 256], strides = [1, 1]} : vector<48x256xf32> to vector<8x256xf32>
      %c0_20 = arith.constant 0 : index
      %c0_21 = arith.constant 0 : index
      %40 = vector.load %arg6[%c0_20, %c0_21] : memref<8x256xf32, #tpu.memory_space<vmem>>, vector<8x256xf32>
      tpu.vector_store %arg6[%c0_20, %c0_21], %39 {strides = array<i32>} : memref<8x256xf32, #tpu.memory_space<vmem>>, vector<8x256xf32>,
      %41 = vector.extract_strided_slice %38 {offsets = [8, 0], sizes = [8, 256], strides = [1, 1]} : vector<48x256xf32> to vector<8x256xf32>
      %c0_22 = arith.constant 0 : index
      %c0_23 = arith.constant 0 : index
      %42 = vector.load %arg7[%c0_22, %c0_23] : memref<8x256xf32, #tpu.memory_space<vmem>>, vector<8x256xf32>
      tpu.vector_store %arg7[%c0_22, %c0_23], %41 {strides = array<i32>} : memref<8x256xf32, #tpu.memory_space<vmem>>, vector<8x256xf32>,
      %43 = vector.extract_strided_slice %38 {offsets = [16, 0], sizes = [32, 256], strides = [1, 1]} : vector<48x256xf32> to vector<32x256xf32>
      %44 = arith.truncf %43 : vector<32x256xf32> to vector<32x256xbf16>
      %c0_24 = arith.constant 0 : index
      %c0_25 = arith.constant 0 : index
      %45 = vector.load %arg8[%c0_24, %c0_25] : memref<40x256xbf16, #tpu.memory_space<vmem>>, vector<32x256xbf16>
      tpu.vector_store %arg8[%c0_24, %c0_25], %44 {strides = array<i32>} : memref<40x256xbf16, #tpu.memory_space<vmem>>, vector<32x256xbf16>,
      %46 = tpu.iota {dimensions = array<i32: 0>} : vector<8x256xi32>
      %c0_i32_26 = arith.constant 0 : i32
      %47 = vector.broadcast %c0_i32_26 : i32 to vector<8x256xi32>
      %48 = arith.cmpi eq, %46, %47 : vector<8x256xi32>
      %cst_27 = arith.constant 1.000000e+00 : f32
      %cst_28 = arith.constant 0.000000e+00 : f32
      %49 = vector.broadcast %cst_27 : f32 to vector<8x256xf32>
      %50 = vector.broadcast %cst_28 : f32 to vector<8x256xf32>
      %51 = arith.select %48, %49, %50 : vector<8x256xi1>, vector<8x256xf32>
      %52 = arith.truncf %51 : vector<8x256xf32> to vector<8x256xbf16>
      %c32 = arith.constant 32 : index
      %c0_29 = arith.constant 0 : index
      %53 = vector.load %arg8[%c32, %c0_29] : memref<40x256xbf16, #tpu.memory_space<vmem>>, vector<8x256xbf16>
      tpu.vector_store %arg8[%c32, %c0_29], %52 {strides = array<i32>} : memref<40x256xbf16, #tpu.memory_space<vmem>>, vector<8x256xbf16>,
    } else {
    }
    %c256_i32 = arith.constant 256 : i32
    %3 = arith.muli %arg1, %c256_i32 : i32
    %4 = tpu.assume_multiple %3, 256 : i32
    %c0 = arith.constant 0 : index
    %5 = arith.index_cast %4 : i32 to index
    %6 = vector.load %arg7[%c0, %5] : memref<8x256xf32, #tpu.memory_space<vmem>>, vector<8x256xf32>
    %c0_1 = arith.constant 0 : index
    %c0_2 = arith.constant 0 : index
    %7 = vector.load %arg6[%c0_1, %c0_2] : memref<8x256xf32, #tpu.memory_space<vmem>>, vector<8x256xf32>
    %cst = arith.constant dense<0.000000e+00> : vector<256x256xf32>
    %8 = tpu.matmul %7, %6, %cst {dimension_numbers = #tpu.dot_dimension_numbers<[0], [0], [1], [1], [0, 1, 1, 1], [], []>} : vector<8x256xf32>, vector<8x256xf32>, vector<256x256xf32> -> vector<256x256xf32>
    %cst_3 = arith.constant dense<0xFF800000> : vector<256xf32>
    %9 = vector.multi_reduction <maximumf>, %8, %cst_3 [0] : vector<256x256xf32> to vector<256xf32>
    %10 = vector.shape_cast %9 : vector<256xf32> to vector<1x256xf32>
    %11 = vector.broadcast %10 : vector<1x256xf32> to vector<256x256xf32>
    %12 = arith.subf %8, %11 : vector<256x256xf32>
    %13 = math.exp %12 : vector<256x256xf32>
    %14 = arith.truncf %13 : vector<256x256xf32> to vector<256x256xbf16>
    %c0_4 = arith.constant 0 : index
    %c0_5 = arith.constant 0 : index
    %15 = vector.load %arg8[%c0_4, %c0_5] : memref<40x256xbf16, #tpu.memory_space<vmem>>, vector<40x256xbf16>
    %cst_6 = arith.constant dense<0.000000e+00> : vector<40x256xf32>
    %16 = tpu.matmul %15, %14, %cst_6 {dimension_numbers = #tpu.dot_dimension_numbers<[1], [0], [0], [1], [0, 0, 1, 1], [], []>} : vector<40x256xbf16>, vector<256x256xbf16>, vector<40x256xf32> -> vector<40x256xf32>
    %17 = vector.extract_strided_slice %16 {offsets = [0, 0], sizes = [32, 256], strides = [1, 1]} : vector<40x256xf32> to vector<32x256xf32>
    %18 = vector.extract_strided_slice %16 {offsets = [32, 0], sizes = [1, 256], strides = [1, 1]} : vector<40x256xf32> to vector<1x256xf32>
    %c0_7 = arith.constant 0 : index
    %19 = memref.load %arg4[%c0_7] : memref<1xf32, #tpu.memory_space<smem>>
    %20 = tpu.reciprocal %18 {approx = true} : vector<1x256xf32> -> vector<1x256xf32>
    %21 = vector.broadcast %19 : f32 to vector<1x256xf32>
    %22 = arith.mulf %21, %20 : vector<1x256xf32>
    %c0_8 = arith.constant 0 : index
    %c0_9 = arith.constant 0 : index
    %23 = arith.index_cast %4 : i32 to index
    %24 = vector.load %arg2[%c0_8, %c0_9, %23] : memref<1x32x256xf32, #tpu.memory_space<vmem>>, vector<1x32x256xf32>
    %25 = vector.shape_cast %24 : vector<1x32x256xf32> to vector<32x256xf32>
    %26 = vector.broadcast %22 : vector<1x256xf32> to vector<32x256xf32>
    %27 = arith.mulf %17, %26 : vector<32x256xf32>
    %28 = arith.addf %27, %25 : vector<32x256xf32>
    %c0_10 = arith.constant 0 : index
    %c0_11 = arith.constant 0 : index
    %c0_12 = arith.constant 0 : index
    %29 = vector.load %arg5[%c0_10, %c0_11, %c0_12] : memref<1x32x256xf32, #tpu.memory_space<vmem>>, vector<1x32x256xf32>
    %30 = vector.shape_cast %29 : vector<1x32x256xf32> to vector<32x256xf32>
    %31 = vector.shape_cast %28 : vector<32x256xf32> to vector<1x32x256xf32>
    tpu.vector_store %arg5[%c0_10, %c0_11, %c0_12], %31 {strides = array<i32>} : memref<1x32x256xf32, #tpu.memory_space<vmem>>, vector<1x32x256xf32>,
    return
  }
  func.func @transform_0(%arg0: i32, %arg1: i32) -> (i32, i32, i32) {
    %c0_i32 = arith.constant 0 : i32
    %c0_i32_0 = arith.constant 0 : i32
    %c0_i32_1 = arith.constant 0 : i32
    return %arg0, %c0_i32, %c0_i32_0 : i32, i32, i32
  }
  func.func @transform_1(%arg0: i32, %arg1: i32) -> (i32, i32) {
    %c0_i32 = arith.constant 0 : i32
    %c0_i32_0 = arith.constant 0 : i32
    %c0_i32_1 = arith.constant 0 : i32
    return %c0_i32, %c0_i32_0 : i32, i32
  }
  func.func @transform_2(%arg0: i32, %arg1: i32) -> i32 {
    %c0_i32 = arith.constant 0 : i32
    %c0_i32_0 = arith.constant 0 : i32
    return %c0_i32 : i32
  }
  func.func @transform_3(%arg0: i32, %arg1: i32) -> (i32, i32, i32) {
    %c0_i32 = arith.constant 0 : i32
    %c0_i32_0 = arith.constant 0 : i32
    return %arg0, %c0_i32, %arg1 : i32, i32, i32
  }
}

</mosaic_0001>

<llo_original>
// kernel: m3_self_attention_feature_extractor.1
$region0: #{m3_self_attention_feature_extractor.1}
  #allocation0 [shape = 'u32[]', space=smem, size = 0x4, offset = 0x4, fixed_abs, tag = 'smem constant byte address 0x4 - core index']
  #allocation1 [shape = 'u32[144,128]{1,0:T(1,128)}', space=vmem, size = 0x12000, scoped, tag = 'internal scratch']
  #allocation2 [shape = 'f32[8,256]{1,0:T(8,128)}', space=vmem, size = 0x2000, scoped, tag = 'scratch operand']
  #allocation3 [shape = 'f32[8,256]{1,0:T(8,128)}', space=vmem, size = 0x2000, scoped, tag = 'scratch operand']
  #allocation4 [shape = 'bf16[40,256]{1,0:T(8,128)(2,1)}', space=vmem, size = 0x5000, scoped, tag = 'scratch operand']
  #allocation5 [shape = 'f32[1]{0:T(128)S(6)}', space=smem, size = 0x200, scoped, tag = 'scoped memory for m3_self_attention_feature_extractor.1']
  %s0 = inlined_call_operand.vmem [shape: f32[2,32,256], index: 0, kind: input, shape index: {}]
  %s1 = inlined_call_operand.vmem [shape: bf16[48,32], index: 1, kind: input, shape index: {}]
  %s2 = inlined_call_operand.<no memory space> [shape: f32[1], index: 2, kind: input, shape index: {}]
  %s3 = inlined_call_operand.vmem [shape: f32[2,32,256], index: 3, kind: output, shape index: {}]
  %s4 = sld [smem:[#allocation0]]
  $region49: #{m3_self_attention_feature_extractor.1} parent=0
    _
  %s6 = ssub.s32 1, %s4
  %s7 = scalar_select 0, %s6, %s4
  %8 = sst [smem:[#allocation5]] %s2
  loop: start=0, step=1, limit=4
  $region2: #{m3_self_attention_feature_extractor.1} parent=0 // loop_pre_header
    _
  $region3: #{m3_self_attention_feature_extractor.1} parent=0 // loop_header
    %s10 = sphi 0, %s14
    %p11 = scmp.ge.s32.totalorder %s10, 4
    %s17 = sphi 0, %s29
    %s18 = sphi 0, %s25
    %s19 = sphi 0, %s17
    %s20 = sphi 0, %s18
    %s21 = sphi 0, %s19
    %s22 = sphi 0, %s20
    %s32 = sphi 0, %s34
    %s35 = sphi 0, %s32
    %s36 = sphi 0, %s35
    %s52 = sphi 0, %s36
    %s56 = sphi 0, %s56
    %s58 = sphi 0, %s56
    %s59 = sphi 0, %s58
    %s73 = sphi 0, %s59
    %s77 = sphi 0, %s77
    %s79 = sphi 0, %s77
    %s80 = sphi 0, %s79
    %s94 = sphi 0, %s80
    %s102 = sphi 0, %s104
    %s105 = sphi 0, %s102
    %s106 = sphi 0, %s105
    %s122 = sphi 0, %s106
  $region4: #{m3_self_attention_feature_extractor.1} parent=0 // loop_header_branch
    %13 = sbr.rel (%p11) target = $region8
  $region5: #{m3_self_attention_feature_extractor.1} parent=0 // loop_body
    %s15 = ssub.s32 %s10, 1
    %s16 = ssub.s32 %s10, 2
    %s23 = sadd.s32 1, %s18
    %p24 = scmp.ge.s32.totalorder %s23, 1
    %s25 = scalar_select %p24, 0, %s23
    %s26 = sadd.s32 1, %s17
    %s27 = scalar_select %p24, %s26, %s17
    %p28 = scmp.ge.s32.totalorder %s27, 2
    %s29 = scalar_select %p28, 0, %s27
    %s30 = ssub.s32 %s17, %s29
    %p31 = scmp.eq.s32.totalorder %s30, 0
    %s33 = sadd.s32 %s32, 1
    %s34 = scalar_select %p31, %s32, %s33
    %p37 = pneg %p31
    %p38 = scmp.eq.s32.totalorder %s10, 1
    %p39 = por %p37, %p38
    %p40 = scmp.ne.s32.totalorder %s32, %s35
    %p41 = scmp.eq.s32.totalorder %s10, 0
    %p42 = por %p40, %p41
    %p43 = scmp.ne.s32.totalorder %s32, %s35
    %p44 = scmp.eq.s32.totalorder %s15, 1
    %p45 = por %p43, %p44
    %p46 = scmp.ne.s32.totalorder %s35, %s36
    %p47 = scmp.eq.s32.totalorder %s15, 0
    %p48 = por %p46, %p47
    %p49 = scmp.ne.s32.totalorder %s35, %s36
    %p50 = scmp.eq.s32.totalorder %s16, 1
    %p51 = por %p49, %p50
    %p53 = scmp.ne.s32.totalorder %s36, %s52
    %p54 = scmp.eq.s32.totalorder %s16, 0
    %p55 = por %p53, %p54
    %s57 = sadd.s32 %s56, 1
    %p60 = scmp.eq.s32.totalorder %s10, 1
    %p61 = scmp.ne.s32.totalorder %s56, %s58
    %p62 = scmp.eq.s32.totalorder %s10, 0
    %p63 = por %p61, %p62
    %p64 = scmp.ne.s32.totalorder %s56, %s58
    %p65 = scmp.eq.s32.totalorder %s15, 1
    %p66 = por %p64, %p65
    %p67 = scmp.ne.s32.totalorder %s58, %s59
    %p68 = scmp.eq.s32.totalorder %s15, 0
    %p69 = por %p67, %p68
    %p70 = scmp.ne.s32.totalorder %s58, %s59
    %p71 = scmp.eq.s32.totalorder %s16, 1
    %p72 = por %p70, %p71
    %p74 = scmp.ne.s32.totalorder %s59, %s73
    %p75 = scmp.eq.s32.totalorder %s16, 0
    %p76 = por %p74, %p75
    %s78 = sadd.s32 %s77, 1
    %p81 = scmp.eq.s32.totalorder %s10, 1
    %p82 = scmp.ne.s32.totalorder %s77, %s79
    %p83 = scmp.eq.s32.totalorder %s10, 0
    %p84 = por %p82, %p83
    %p85 = scmp.ne.s32.totalorder %s77, %s79
    %p86 = scmp.eq.s32.totalorder %s15, 1
    %p87 = por %p85, %p86
    %p88 = scmp.ne.s32.totalorder %s79, %s80
    %p89 = scmp.eq.s32.totalorder %s15, 0
    %p90 = por %p88, %p89
    %p91 = scmp.ne.s32.totalorder %s79, %s80
    %p92 = scmp.eq.s32.totalorder %s16, 1
    %p93 = por %p91, %p92
    %p95 = scmp.ne.s32.totalorder %s80, %s94
    %p96 = scmp.eq.s32.totalorder %s16, 0
    %p97 = por %p95, %p96
    %s98 = ssub.s32 %s17, %s29
    %s99 = ssub.s32 %s18, %s25
    %s100 = sor.u32 %s98, %s99
    %p101 = scmp.eq.s32.totalorder %s100, 0
    %s103 = sadd.s32 %s102, 1
    %s104 = scalar_select %p101, %s102, %s103
    %p107 = pneg %p101
    %p108 = scmp.eq.s32.totalorder %s10, 1
    %p109 = por %p107, %p108
    %p110 = scmp.ne.s32.totalorder %s102, %s105
    %p111 = scmp.eq.s32.totalorder %s10, 0
    %p112 = por %p110, %p111
    %p113 = scmp.ne.s32.totalorder %s102, %s105
    %p114 = scmp.eq.s32.totalorder %s15, 1
    %p115 = por %p113, %p114
    %p116 = scmp.ne.s32.totalorder %s105, %s106
    %p117 = scmp.eq.s32.totalorder %s15, 0
    %p118 = por %p116, %p117
    %p119 = scmp.ne.s32.totalorder %s105, %s106
    %p120 = scmp.eq.s32.totalorder %s16, 1
    %p121 = por %p119, %p120
    %p123 = scmp.ne.s32.totalorder %s106, %s122
    %p124 = scmp.eq.s32.totalorder %s16, 0
    %p125 = por %p123, %p124
    %p126 = scmp.le.s32.totalorder 1, %s10
    %p127 = scmp.lt.s32.totalorder %s10, 3
    %p128 = pnand %p126, %p127
    %p129 = pneg %p128
    // Predicated region
    $region9: #{m3_self_attention_feature_extractor.1} parent=5 // pred_check
      _
    $region10: #{m3_self_attention_feature_extractor.1} parent=5 // pred_check_branch
      %131 = sbr.rel (%p128) target = $region12
    $region11: #{m3_self_attention_feature_extractor.1} parent=5 // pred_region
      %s132 = ssub.s32 %s10, 1
      // Predicated region
      $region13: #{m3_self_attention_feature_extractor.1} parent=11 // pred_check
        %p133 = pneg %p69
      $region14: #{m3_self_attention_feature_extractor.1} parent=11 // pred_check_branch
        %135 = sbr.rel (%p133) target = $region16
      $region15: #{m3_self_attention_feature_extractor.1} parent=11 // pred_region
        _
      $region16: #{m3_self_attention_feature_extractor.1} parent=11 // pred_fallthru
        _
      // Predicated region
      $region17: #{m3_self_attention_feature_extractor.1} parent=11 // pred_check
        %p136 = pneg %p90
      $region18: #{m3_self_attention_feature_extractor.1} parent=11 // pred_check_branch
        %138 = sbr.rel (%p136) target = $region20
      $region19: #{m3_self_attention_feature_extractor.1} parent=11 // pred_region
        _
      $region20: #{m3_self_attention_feature_extractor.1} parent=11 // pred_fallthru
        _
    $region12: #{m3_self_attention_feature_extractor.1} parent=5 // pred_fallthru
      _
    %p139 = scmp.lt.s32.totalorder %s10, 2
    // Predicated region
    $region21: #{m3_self_attention_feature_extractor.1} parent=5 // pred_check
      %p140 = pneg %p139
    $region22: #{m3_self_attention_feature_extractor.1} parent=5 // pred_check_branch
      %142 = sbr.rel (%p140) target = $region24
    $region23: #{m3_self_attention_feature_extractor.1} parent=5 // pred_region
      // Predicated region
      $region25: #{m3_self_attention_feature_extractor.1} parent=23 // pred_check
        %p143 = pneg %p42
      $region26: #{m3_self_attention_feature_extractor.1} parent=23 // pred_check_branch
        %145 = sbr.rel (%p143) target = $region28
      $region27: #{m3_self_attention_feature_extractor.1} parent=23 // pred_region
        %p146 = scmp.lt.s32.totalorder %s17, 1
        %s147 = scalar_select %p146, %s17, 1
        %s148 = smul.addr %s147, 8
        %s149 = smul.addr %s148, 8
        %s150 = scalar_lea.vmem %s0, %s149
      $region28: #{m3_self_attention_feature_extractor.1} parent=23 // pred_fallthru
        _
    $region24: #{m3_self_attention_feature_extractor.1} parent=5 // pred_fallthru
      _
    %p151 = scmp.le.s32.totalorder 1, %s10
    %p152 = scmp.lt.s32.totalorder %s10, 3
    %p153 = pnand %p151, %p152
    %p154 = pneg %p153
    // Predicated region
    $region29: #{m3_self_attention_feature_extractor.1} parent=5 // pred_check
      _
    $region30: #{m3_self_attention_feature_extractor.1} parent=5 // pred_check_branch
      %156 = sbr.rel (%p153) target = $region32
    $region31: #{m3_self_attention_feature_extractor.1} parent=5 // pred_region
      %s157 = ssub.s32 %s10, 1
      %p158 = scmp.lt.s32.totalorder %s19, 1
      %s159 = scalar_select %p158, %s19, 1
      %s160 = smul.addr %s159, 8
      %s161 = smul.addr %s160, 8
      %s162 = scalar_lea.vmem %s0, %s161
      %p163 = pneg %p48
      %p164 = pneg %p45
      %p165 = pneg %p69
      %p166 = pneg %p66
      %p167 = pneg %p90
      %p168 = pneg %p87
      %p169 = pneg %p118
      %p170 = pneg %p115
      %s171 = smul.u32 2, %s20
      %p172 = scmp.lt.s32.totalorder %s19, 1
      %s173 = scalar_select %p172, %s19, 1
      %p174 = scmp.lt.s32.totalorder %s171, 1
      %s175 = scalar_select %p174, %s171, 1
      %s176 = smul.addr %s173, 8
      %s177 = sadd.s32 %s175, %s176
      %s178 = smul.addr %s177, 8
      %s179 = scalar_lea.vmem %s3, %s178
      %p180 = scmp.lt.s32.totalorder %s19, 1
      %s181 = scalar_select %p180, %s19, 1
      %s182 = smul.addr %s181, 8
      %s183 = smul.addr %s182, 8
      %s184 = scalar_lea.vmem %s0, %s183
      %s185 = smul.u32 2, %s20
      %p186 = scmp.lt.s32.totalorder %s19, 1
      %s187 = scalar_select %p186, %s19, 1
      %p188 = scmp.lt.s32.totalorder %s185, 1
      %s189 = scalar_select %p188, %s185, 1
      %s190 = smul.addr %s187, 8
      %s191 = sadd.s32 %s189, %s190
      %s192 = smul.addr %s191, 8
      %s193 = scalar_lea.vmem %s3, %s192
      %s194 = smul.u32 2, %s20
      %p196 = scmp.eq.s32.totalorder %s20, 0
      // Predicated region
      $region33: #{m3_self_attention_feature_extractor.1} parent=31 // pred_check
        %p197 = pneg %p196
      $region34: #{m3_self_attention_feature_extractor.1} parent=31 // pred_check_branch
        %199 = sbr.rel (%p197) target = $region36
      $region35: #{m3_self_attention_feature_extractor.1} parent=31 // pred_region
        %v200 = vld [vmem:[%s184] sm:$0xff]
        %v201 = vld [vmem:[%s184 + $0x8] sm:$0xff]
        %v202 = vld [vmem:[%s184 + $0x10] sm:$0xff]
        %v203 = vld [vmem:[%s184 + $0x18] sm:$0xff]
        %v204 = vld [vmem:[%s184 + $0x20] sm:$0xff]
        %v205 = vld [vmem:[%s184 + $0x28] sm:$0xff]
        %v206 = vld [vmem:[%s184 + $0x30] sm:$0xff]
        %v207 = vld [vmem:[%s184 + $0x38] sm:$0xff]
        %v208 = vpack.c.bf16 %v202, %v200
        %v209 = vpack.c.bf16 %v203, %v201
        %v210 = vpack.c.bf16 %v206, %v204
        %v211 = vpack.c.bf16 %v207, %v205
        %v212 = vld [vmem:[%s1] sm:$0xf]
        %v213 = vld [vmem:[%s1 + $0x4] sm:$0xf]
        %v214 = vld [vmem:[%s1 + $0x8] sm:$0xf]
        %v215 = vld [vmem:[%s1 + $0xc] sm:$0xf]
        %v216 = vld [vmem:[%s1 + $0x10] sm:$0xf]
        %v217 = vld [vmem:[%s1 + $0x14] sm:$0xf]
        %v224 = vunpack.c.l.b16 %v212
        %v225 = vunpack.c.l.b16 %v213
        %v226 = vunpack.c.l.b16 %v214
        %v227 = vunpack.c.l.b16 %v215
        %v228 = vunpack.c.l.b16 %v216
        %v229 = vunpack.c.l.b16 %v217
        %v230 = vpack.c.b16 %v225, %v224
        %v231 = vpack.c.b16 %v227, %v226
        %v232 = vpack.c.b16 %v229, %v228
        %vm233 = vcmask 261120
        %v235 = vsel %vm233, %v230, 0
        %v238 = vsel %vm233, %v231, 0
        %v241 = vsel %vm233, %v232, 0
        %243 = vmatprep.subr.bf16.mxu0 %v209
        %244 = vmatpush1.bf16.msra.mxu0 %v208
        %245 = vmatprep.subr.bf16.mxu0 %v211
        %246 = vmatpush1.bf16.msra.mxu0 %v210
        %247 = vmatprep.subr.bf16.mxu0 0
        %248 = vmatpush1.bf16.msra.mxu0 0
        %249 = vmatprep.subr.bf16.mxu0 0
        %250 = vmatpush1.bf16.msra.mxu0 0
        %251 = vmatprep.subr.bf16.mxu0 0
        %252 = vmatpush1.bf16.msra.mxu0 0
        %253 = vmatprep.subr.bf16.mxu0 0
        %254 = vmatpush1.bf16.msra.mxu0 0
        %255 = vmatprep.subr.bf16.mxu0 0
        %256 = vmatpush1.bf16.msra.mxu0 0
        %257 = vmatprep.subr.bf16.mxu0 0
        %258 = vmatpush1.bf16.msra.mxu0 0
        %259 = vmatprep.subr.bf16.mxu0 0
        %260 = vmatpush1.bf16.msra.mxu0 0
        %261 = vmatprep.subr.bf16.mxu0 0
        %262 = vmatpush1.bf16.msra.mxu0 0
        %263 = vmatprep.subr.bf16.mxu0 0
        %264 = vmatpush1.bf16.msra.mxu0 0
        %265 = vmatprep.subr.bf16.mxu0 0
        %266 = vmatpush1.bf16.msra.mxu0 0
        %267 = vmatprep.subr.bf16.mxu0 0
        %268 = vmatpush1.bf16.msra.mxu0 0
        %269 = vmatprep.subr.bf16.mxu0 0
        %270 = vmatpush1.bf16.msra.mxu0 0
        %271 = vmatprep.subr.bf16.mxu0 0
        %272 = vmatpush1.bf16.msra.mxu0 0
        %273 = vmatprep.subr.bf16.mxu0 0
        %274 = vmatpush1.bf16.msra.mxu0 0
        %275 = vmatprep.mubr.bf16.mxu0 0
        %276 = vmatmul.mubr.bf16.gmra.mrb[0].mxu0 %v235
        %v277 = vpop.f32.mrb[0].mxu0
        %v278 = vadd.f32 0.0, %v277
        %v279 = vpop.f32.mrb[0].mxu0
        %v280 = vadd.f32 0.0, %v279
        %v281 = vpop.f32.mrb[0].mxu0
        %v282 = vadd.f32 0.0, %v281
        %v283 = vpop.f32.mrb[0].mxu0
        %v284 = vadd.f32 0.0, %v283
        %285 = vmatprep.mubr.bf16.mxu0 0
        %286 = vmatmul.mubr.bf16.gmra.mrb[0].mxu0 %v238
        %v287 = vpop.f32.mrb[0].mxu0
        %v288 = vadd.f32 0.0, %v287
        %v289 = vpop.f32.mrb[0].mxu0
        %v290 = vadd.f32 0.0, %v289
        %v291 = vpop.f32.mrb[0].mxu0
        %v292 = vadd.f32 0.0, %v291
        %v293 = vpop.f32.mrb[0].mxu0
        %v294 = vadd.f32 0.0, %v293
        %295 = vmatprep.mubr.bf16.mxu0 0
        %296 = vmatmul.mubr.bf16.gmra.mrb[0].mxu0 %v241
        %v297 = vpop.f32.mrb[0].mxu0
        %v298 = vadd.f32 0.0, %v297
        %v299 = vpop.f32.mrb[0].mxu0
        %v300 = vadd.f32 0.0, %v299
        %v301 = vpop.f32.mrb[0].mxu0
        %v302 = vadd.f32 0.0, %v301
        %v303 = vpop.f32.mrb[0].mxu0
        %v304 = vadd.f32 0.0, %v303
        %305 = vdwg.mxu0
        %v306 = vmax.f32 %v278, 0.0
        %v307 = vmax.f32 %v280, 0.0
        %v308 = vmax.f32 %v282, 0.0
        %v309 = vmax.f32 %v284, 0.0
        %v310 = vmax.f32 %v288, 0.0
        %v311 = vmax.f32 %v290, 0.0
        %v312 = vmax.f32 %v292, 0.0
        %v313 = vmax.f32 %v294, 0.0
        %v314 = vmax.f32 %v298, 0.0
        %v315 = vmax.f32 %v300, 0.0
        %v316 = vmax.f32 %v302, 0.0
        %v317 = vmax.f32 %v304, 0.0
        %318 = vst [vmem:[#allocation2] sm:$0xff] %v306
        %319 = vst [vmem:[#allocation2 + $0x8] sm:$0xff] %v307
        %320 = vst [vmem:[#allocation3] sm:$0xff] %v308
        %321 = vst [vmem:[#allocation3 + $0x8] sm:$0xff] %v309
        %v322 = vpack.c.bf16 %v312, %v310
        %v323 = vpack.c.bf16 %v313, %v311
        %v324 = vpack.c.bf16 %v316, %v314
        %v325 = vpack.c.bf16 %v317, %v315
        %v330 = vunpack.c.l.b16 %v322
        %v331 = vunpack.c.l.b16 %v323
        %v332 = vunpack.c.h.b16 %v322
        %v333 = vunpack.c.h.b16 %v323
        %v334 = vunpack.c.l.b16 %v324
        %v335 = vunpack.c.l.b16 %v325
        %v336 = vunpack.c.h.b16 %v324
        %v337 = vunpack.c.h.b16 %v325
        %v338 = vpack.c.b16 %v331, %v330
        %v339 = vpack.c.b16 %v333, %v332
        %v340 = vpack.c.b16 %v335, %v334
        %v341 = vpack.c.b16 %v337, %v336
        %346 = vst [vmem:[#allocation4] sm:$0xff] %v338
        %347 = vst [vmem:[#allocation4 + $0x8] sm:$0xff] %v339
        %348 = vst [vmem:[#allocation4 + $0x10] sm:$0xff] %v340
        %349 = vst [vmem:[#allocation4 + $0x18] sm:$0xff] %v341
        %v350 = vlaneseq
        %v351 = vshrl.u32 %v350, 7
        %vm352 = vcmp.eq.s32.totalorder %v351, 0
        %v353 = vsel %vm352, 1.0, 0.0
        %v354 = vpack.c.bf16 %v353, %v353
        %v357 = vunpack.c.l.s4 839922192
        %v358 = vunpack.c.0.s8 %v357
        %v359 = vlaneseq
        %v360 = vshrl.u32 %v359, 7
        %v361 = vsub.s32 %v358, %v360
        %v362 = vrot.slane %v354, %v361
        %364 = vst [vmem:[#allocation4 + $0x20] sm:$0xff] %v362
      $region36: #{m3_self_attention_feature_extractor.1} parent=31 // pred_fallthru
        _
      %s365 = smul.u32 %s20, 256
      %s366 = sshra.s32 %s365, 7
      %s367 = sand.u32 %s365, 127
      %s368 = smul.addr %s366, 8
      %s369 = scalar_lea.vmem [#allocation3], %s368
      %v370 = vld [vmem:[%s369] sm:$0xff]
      %v371 = vld [vmem:[%s369 + $0x8] sm:$0xff]
      %v372 = vld [vmem:[#allocation2] sm:$0xff]
      %v373 = vld [vmem:[#allocation2 + $0x8] sm:$0xff]
      %374 = vxpose.xlu0.b32.start [1/16] %v372, 128
      %375 = vxpose.xlu0.b32.cont [2/16] 0.0, 128
      %376 = vxpose.xlu0.b32.cont [3/16] 0.0, 128
      %377 = vxpose.xlu0.b32.cont [4/16] 0.0, 128
      %378 = vxpose.xlu0.b32.cont [5/16] 0.0, 128
      %379 = vxpose.xlu0.b32.cont [6/16] 0.0, 128
      %380 = vxpose.xlu0.b32.cont [7/16] 0.0, 128
      %381 = vxpose.xlu0.b32.cont [8/16] 0.0, 128
      %382 = vxpose.xlu0.b32.cont [9/16] 0.0, 128
      %383 = vxpose.xlu0.b32.cont [10/16] 0.0, 128
      %384 = vxpose.xlu0.b32.cont [11/16] 0.0, 128
      %385 = vxpose.xlu0.b32.cont [12/16] 0.0, 128
      %386 = vxpose.xlu0.b32.cont [13/16] 0.0, 128
      %387 = vxpose.xlu0.b32.cont [14/16] 0.0, 128
      %388 = vxpose.xlu0.b32.cont [15/16] 0.0, 128
      %389 = vxpose.xlu0.b32.end [16/16] 0.0, 128
      %v390 = vpop.trf.xlu0
      %v391 = vpop.trf.xlu0
      %v392 = vpop.trf.xlu0
      %v393 = vpop.trf.xlu0
      %v394 = vpop.trf.xlu0
      %v395 = vpop.trf.xlu0
      %v396 = vpop.trf.xlu0
      %v397 = vpop.trf.xlu0
      %v398 = vpop.trf.xlu0
      %v399 = vpop.trf.xlu0
      %v400 = vpop.trf.xlu0
      %v401 = vpop.trf.xlu0
      %v402 = vpop.trf.xlu0
      %v403 = vpop.trf.xlu0
      %v404 = vpop.trf.xlu0
      %v405 = vpop.trf.xlu0
      %406 = vxpose.xlu0.b32.start [1/16] %v373, 128
      %407 = vxpose.xlu0.b32.cont [2/16] 0.0, 128
      %408 = vxpose.xlu0.b32.cont [3/16] 0.0, 128
      %409 = vxpose.xlu0.b32.cont [4/16] 0.0, 128
      %410 = vxpose.xlu0.b32.cont [5/16] 0.0, 128
      %411 = vxpose.xlu0.b32.cont [6/16] 0.0, 128
      %412 = vxpose.xlu0.b32.cont [7/16] 0.0, 128
      %413 = vxpose.xlu0.b32.cont [8/16] 0.0, 128
      %414 = vxpose.xlu0.b32.cont [9/16] 0.0, 128
      %415 = vxpose.xlu0.b32.cont [10/16] 0.0, 128
      %416 = vxpose.xlu0.b32.cont [11/16] 0.0, 128
      %417 = vxpose.xlu0.b32.cont [12/16] 0.0, 128
      %418 = vxpose.xlu0.b32.cont [13/16] 0.0, 128
      %419 = vxpose.xlu0.b32.cont [14/16] 0.0, 128
      %420 = vxpose.xlu0.b32.cont [15/16] 0.0, 128
      %421 = vxpose.xlu0.b32.end [16/16] 0.0, 128
      %v422 = vpop.trf.xlu0
      %v423 = vpop.trf.xlu0
      %v424 = vpop.trf.xlu0
      %v425 = vpop.trf.xlu0
      %v426 = vpop.trf.xlu0
      %v427 = vpop.trf.xlu0
      %v428 = vpop.trf.xlu0
      %v429 = vpop.trf.xlu0
      %v430 = vpop.trf.xlu0
      %v431 = vpop.trf.xlu0
      %v432 = vpop.trf.xlu0
      %v433 = vpop.trf.xlu0
      %v434 = vpop.trf.xlu0
      %v435 = vpop.trf.xlu0
      %v436 = vpop.trf.xlu0
      %v437 = vpop.trf.xlu0
      %vm438 = vcmask 64512
      %v440 = vsel %vm438, %v390, 0
      %v443 = vsel %vm438, %v391, 0
      %v446 = vsel %vm438, %v392, 0
      %v449 = vsel %vm438, %v393, 0
      %v452 = vsel %vm438, %v394, 0
      %v455 = vsel %vm438, %v395, 0
      %v458 = vsel %vm438, %v396, 0
      %v461 = vsel %vm438, %v397, 0
      %v464 = vsel %vm438, %v398, 0
      %v467 = vsel %vm438, %v399, 0
      %v470 = vsel %vm438, %v400, 0
      %v473 = vsel %vm438, %v401, 0
      %v476 = vsel %vm438, %v402, 0
      %v479 = vsel %vm438, %v403, 0
      %v482 = vsel %vm438, %v404, 0
      %v485 = vsel %vm438, %v405, 0
      %v488 = vsel %vm438, %v422, 0
      %v491 = vsel %vm438, %v423, 0
      %v494 = vsel %vm438, %v424, 0
      %v497 = vsel %vm438, %v425, 0
      %v500 = vsel %vm438, %v426, 0
      %v503 = vsel %vm438, %v427, 0
      %v506 = vsel %vm438, %v428, 0
      %v509 = vsel %vm438, %v429, 0
      %v512 = vsel %vm438, %v430, 0
      %v515 = vsel %vm438, %v431, 0
      %v518 = vsel %vm438, %v432, 0
      %v521 = vsel %vm438, %v433, 0
      %v524 = vsel %vm438, %v434, 0
      %v527 = vsel %vm438, %v435, 0
      %v530 = vsel %vm438, %v436, 0
      %v533 = vsel %vm438, %v437, 0
      %535 = vmatprep.subr.mxu0 %v371
      %536 = vmatpush1.msra.mxu0 %v370
      %537 = vmatprep.subr.mxu0 0.0
      %538 = vmatpush1.msra.mxu0 0.0
      %539 = vmatprep.subr.mxu0 0.0
      %540 = vmatpush1.msra.mxu0 0.0
      %541 = vmatprep.subr.mxu0 0.0
      %542 = vmatpush1.msra.mxu0 0.0
      %543 = vmatprep.subr.mxu0 0.0
      %544 = vmatpush1.msra.mxu0 0.0
      %545 = vmatprep.subr.mxu0 0.0
      %546 = vmatpush1.msra.mxu0 0.0
      %547 = vmatprep.subr.mxu0 0.0
      %548 = vmatpush1.msra.mxu0 0.0
      %549 = vmatprep.subr.mxu0 0.0
      %550 = vmatpush1.msra.mxu0 0.0
      %551 = vmatprep.subr.mxu0 0.0
      %552 = vmatpush1.msra.mxu0 0.0
      %553 = vmatprep.subr.mxu0 0.0
      %554 = vmatpush1.msra.mxu0 0.0
      %555 = vmatprep.subr.mxu0 0.0
      %556 = vmatpush1.msra.mxu0 0.0
      %557 = vmatprep.subr.mxu0 0.0
      %558 = vmatpush1.msra.mxu0 0.0
      %559 = vmatprep.subr.mxu0 0.0
      %560 = vmatpush1.msra.mxu0 0.0
      %561 = vmatprep.subr.mxu0 0.0
      %562 = vmatpush1.msra.mxu0 0.0
      %563 = vmatprep.subr.mxu0 0.0
      %564 = vmatpush1.msra.mxu0 0.0
      %565 = vmatprep.subr.mxu0 0.0
      %566 = vmatpush1.msra.mxu0 0.0
      %567 = vmatprep.subr.mxu0 0.0
      %568 = vmatpush1.msra.mxu0 0.0
      %569 = vmatprep.subr.mxu0 0.0
      %570 = vmatpush1.msra.mxu0 0.0
      %571 = vmatprep.subr.mxu0 0.0
      %572 = vmatpush1.msra.mxu0 0.0
      %573 = vmatprep.subr.mxu0 0.0
      %574 = vmatpush1.msra.mxu0 0.0
      %575 = vmatprep.subr.mxu0 0.0
      %576 = vmatpush1.msra.mxu0 0.0
      %577 = vmatprep.subr.mxu0 0.0
      %578 = vmatpush1.msra.mxu0 0.0
      %579 = vmatprep.subr.mxu0 0.0
      %580 = vmatpush1.msra.mxu0 0.0
      %581 = vmatprep.subr.mxu0 0.0
      %582 = vmatpush1.msra.mxu0 0.0
      %583 = vmatprep.subr.mxu0 0.0
      %584 = vmatpush1.msra.mxu0 0.0
      %585 = vmatprep.subr.mxu0 0.0
      %586 = vmatpush1.msra.mxu0 0.0
      %587 = vmatprep.subr.mxu0 0.0
      %588 = vmatpush1.msra.mxu0 0.0
      %589 = vmatprep.subr.mxu0 0.0
      %590 = vmatpush1.msra.mxu0 0.0
      %591 = vmatprep.subr.mxu0 0.0
      %592 = vmatpush1.msra.mxu0 0.0
      %593 = vmatprep.subr.mxu0 0.0
      %594 = vmatpush1.msra.mxu0 0.0
      %595 = vmatprep.subr.mxu0 0.0
      %596 = vmatpush1.msra.mxu0 0.0
      %597 = vmatprep.subr.mxu0 0.0
      %598 = vmatpush1.msra.mxu0 0.0
      %599 = vmatprep.mubr.f32.mxu0 0.0
      %600 = vmatmul.mubr.f32.gmra.mrb[0].mxu0 %v440
      %v601 = vpop.f32.mrb[0].mxu0
      %v602 = vadd.f32 0.0, %v601
      %v603 = vpop.f32.mrb[0].mxu0
      %v604 = vadd.f32 0.0, %v603
      %605 = vmatprep.mubr.f32.mxu0 0.0
      %606 = vmatmul.mubr.f32.gmra.mrb[0].mxu0 %v443
      %v607 = vpop.f32.mrb[0].mxu0
      %v608 = vadd.f32 0.0, %v607
      %v609 = vpop.f32.mrb[0].mxu0
      %v610 = vadd.f32 0.0, %v609
      %611 = vmatprep.mubr.f32.mxu0 0.0
      %612 = vmatmul.mubr.f32.gmra.mrb[0].mxu0 %v446
      %v613 = vpop.f32.mrb[0].mxu0
      %v614 = vadd.f32 0.0, %v613
      %v615 = vpop.f32.mrb[0].mxu0
      %v616 = vadd.f32 0.0, %v615
      %617 = vmatprep.mubr.f32.mxu0 0.0
      %618 = vmatmul.mubr.f32.gmra.mrb[0].mxu0 %v449
      %v619 = vpop.f32.mrb[0].mxu0
      %v620 = vadd.f32 0.0, %v619
      %v621 = vpop.f32.mrb[0].mxu0
      %v622 = vadd.f32 0.0, %v621
      %623 = vmatprep.mubr.f32.mxu0 0.0
      %624 = vmatmul.mubr.f32.gmra.mrb[0].mxu0 %v452
      %v625 = vpop.f32.mrb[0].mxu0
      %v626 = vadd.f32 0.0, %v625
      %v627 = vpop.f32.mrb[0].mxu0
      %v628 = vadd.f32 0.0, %v627
      %629 = vmatprep.mubr.f32.mxu0 0.0
      %630 = vmatmul.mubr.f32.gmra.mrb[0].mxu0 %v455
      %v631 = vpop.f32.mrb[0].mxu0
      %v632 = vadd.f32 0.0, %v631
      %v633 = vpop.f32.mrb[0].mxu0
      %v634 = vadd.f32 0.0, %v633
      %635 = vmatprep.mubr.f32.mxu0 0.0
      %636 = vmatmul.mubr.f32.gmra.mrb[0].mxu0 %v458
      %v637 = vpop.f32.mrb[0].mxu0
      %v638 = vadd.f32 0.0, %v637
      %v639 = vpop.f32.mrb[0].mxu0
      %v640 = vadd.f32 0.0, %v639
      %641 = vmatprep.mubr.f32.mxu0 0.0
      %642 = vmatmul.mubr.f32.gmra.mrb[0].mxu0 %v461
      %v643 = vpop.f32.mrb[0].mxu0
      %v644 = vadd.f32 0.0, %v643
      %v645 = vpop.f32.mrb[0].mxu0
      %v646 = vadd.f32 0.0, %v645
      %647 = vmatprep.mubr.f32.mxu0 0.0
      %648 = vmatmul.mubr.f32.gmra.mrb[0].mxu0 %v464
      %v649 = vpop.f32.mrb[0].mxu0
      %v650 = vadd.f32 0.0, %v649
      %v651 = vpop.f32.mrb[0].mxu0
      %v652 = vadd.f32 0.0, %v651
      %653 = vmatprep.mubr.f32.mxu0 0.0
      %654 = vmatmul.mubr.f32.gmra.mrb[0].mxu0 %v467
      %v655 = vpop.f32.mrb[0].mxu0
      %v656 = vadd.f32 0.0, %v655
      %v657 = vpop.f32.mrb[0].mxu0
      %v658 = vadd.f32 0.0, %v657
      %659 = vmatprep.mubr.f32.mxu0 0.0
      %660 = vmatmul.mubr.f32.gmra.mrb[0].mxu0 %v470
      %v661 = vpop.f32.mrb[0].mxu0
      %v662 = vadd.f32 0.0, %v661
      %v663 = vpop.f32.mrb[0].mxu0
      %v664 = vadd.f32 0.0, %v663
      %665 = vmatprep.mubr.f32.mxu0 0.0
      %666 = vmatmul.mubr.f32.gmra.mrb[0].mxu0 %v473
      %v667 = vpop.f32.mrb[0].mxu0
      %v668 = vadd.f32 0.0, %v667
      %v669 = vpop.f32.mrb[0].mxu0
      %v670 = vadd.f32 0.0, %v669
      %671 = vmatprep.mubr.f32.mxu0 0.0
      %672 = vmatmul.mubr.f32.gmra.mrb[0].mxu0 %v476
      %v673 = vpop.f32.mrb[0].mxu0
      %v674 = vadd.f32 0.0, %v673
      %v675 = vpop.f32.mrb[0].mxu0
      %v676 = vadd.f32 0.0, %v675
      %677 = vmatprep.mubr.f32.mxu0 0.0
      %678 = vmatmul.mubr.f32.gmra.mrb[0].mxu0 %v479
      %v679 = vpop.f32.mrb[0].mxu0
      %v680 = vadd.f32 0.0, %v679
      %v681 = vpop.f32.mrb[0].mxu0
      %v682 = vadd.f32 0.0, %v681
      %683 = vmatprep.mubr.f32.mxu0 0.0
      %684 = vmatmul.mubr.f32.gmra.mrb[0].mxu0 %v482
      %v685 = vpop.f32.mrb[0].mxu0
      %v686 = vadd.f32 0.0, %v685
      %v687 = vpop.f32.mrb[0].mxu0
      %v688 = vadd.f32 0.0, %v687
      %689 = vmatprep.mubr.f32.mxu0 0.0
      %690 = vmatmul.mubr.f32.gmra.mrb[0].mxu0 %v485
      %v691 = vpop.f32.mrb[0].mxu0
      %v692 = vadd.f32 0.0, %v691
      %v693 = vpop.f32.mrb[0].mxu0
      %v694 = vadd.f32 0.0, %v693
      %695 = vmatprep.mubr.f32.mxu0 0.0
      %696 = vmatmul.mubr.f32.gmra.mrb[0].mxu0 %v488
      %v697 = vpop.f32.mrb[0].mxu0
      %v698 = vadd.f32 0.0, %v697
      %v699 = vpop.f32.mrb[0].mxu0
      %v700 = vadd.f32 0.0, %v699
      %701 = vmatprep.mubr.f32.mxu0 0.0
      %702 = vmatmul.mubr.f32.gmra.mrb[0].mxu0 %v491
      %v703 = vpop.f32.mrb[0].mxu0
      %v704 = vadd.f32 0.0, %v703
      %v705 = vpop.f32.mrb[0].mxu0
      %v706 = vadd.f32 0.0, %v705
      %707 = vmatprep.mubr.f32.mxu0 0.0
      %708 = vmatmul.mubr.f32.gmra.mrb[0].mxu0 %v494
      %v709 = vpop.f32.mrb[0].mxu0
      %v710 = vadd.f32 0.0, %v709
      %v711 = vpop.f32.mrb[0].mxu0
      %v712 = vadd.f32 0.0, %v711
      %713 = vmatprep.mubr.f32.mxu0 0.0
      %714 = vmatmul.mubr.f32.gmra.mrb[0].mxu0 %v497
      %v715 = vpop.f32.mrb[0].mxu0
      %v716 = vadd.f32 0.0, %v715
      %v717 = vpop.f32.mrb[0].mxu0
      %v718 = vadd.f32 0.0, %v717
      %719 = vmatprep.mubr.f32.mxu0 0.0
      %720 = vmatmul.mubr.f32.gmra.mrb[0].mxu0 %v500
      %v721 = vpop.f32.mrb[0].mxu0
      %v722 = vadd.f32 0.0, %v721
      %v723 = vpop.f32.mrb[0].mxu0
      %v724 = vadd.f32 0.0, %v723
      %725 = vmatprep.mubr.f32.mxu0 0.0
      %726 = vmatmul.mubr.f32.gmra.mrb[0].mxu0 %v503
      %v727 = vpop.f32.mrb[0].mxu0
      %v728 = vadd.f32 0.0, %v727
      %v729 = vpop.f32.mrb[0].mxu0
      %v730 = vadd.f32 0.0, %v729
      %731 = vmatprep.mubr.f32.mxu0 0.0
      %732 = vmatmul.mubr.f32.gmra.mrb[0].mxu0 %v506
      %v733 = vpop.f32.mrb[0].mxu0
      %v734 = vadd.f32 0.0, %v733
      %v735 = vpop.f32.mrb[0].mxu0
      %v736 = vadd.f32 0.0, %v735
      %737 = vmatprep.mubr.f32.mxu0 0.0
      %738 = vmatmul.mubr.f32.gmra.mrb[0].mxu0 %v509
      %v739 = vpop.f32.mrb[0].mxu0
      %v740 = vadd.f32 0.0, %v739
      %v741 = vpop.f32.mrb[0].mxu0
      %v742 = vadd.f32 0.0, %v741
      %743 = vmatprep.mubr.f32.mxu0 0.0
      %744 = vmatmul.mubr.f32.gmra.mrb[0].mxu0 %v512
      %v745 = vpop.f32.mrb[0].mxu0
      %v746 = vadd.f32 0.0, %v745
      %v747 = vpop.f32.mrb[0].mxu0
      %v748 = vadd.f32 0.0, %v747
      %749 = vmatprep.mubr.f32.mxu0 0.0
      %750 = vmatmul.mubr.f32.gmra.mrb[0].mxu0 %v515
      %v751 = vpop.f32.mrb[0].mxu0
      %v752 = vadd.f32 0.0, %v751
      %v753 = vpop.f32.mrb[0].mxu0
      %v754 = vadd.f32 0.0, %v753
      %755 = vmatprep.mubr.f32.mxu0 0.0
      %756 = vmatmul.mubr.f32.gmra.mrb[0].mxu0 %v518
      %v757 = vpop.f32.mrb[0].mxu0
      %v758 = vadd.f32 0.0, %v757
      %v759 = vpop.f32.mrb[0].mxu0
      %v760 = vadd.f32 0.0, %v759
      %761 = vmatprep.mubr.f32.mxu0 0.0
      %762 = vmatmul.mubr.f32.gmra.mrb[0].mxu0 %v521
      %v763 = vpop.f32.mrb[0].mxu0
      %v764 = vadd.f32 0.0, %v763
      %v765 = vpop.f32.mrb[0].mxu0
      %v766 = vadd.f32 0.0, %v765
      %767 = vmatprep.mubr.f32.mxu0 0.0
      %768 = vmatmul.mubr.f32.gmra.mrb[0].mxu0 %v524
      %v769 = vpop.f32.mrb[0].mxu0
      %v770 = vadd.f32 0.0, %v769
      %v771 = vpop.f32.mrb[0].mxu0
      %v772 = vadd.f32 0.0, %v771
      %773 = vmatprep.mubr.f32.mxu0 0.0
      %774 = vmatmul.mubr.f32.gmra.mrb[0].mxu0 %v527
      %v775 = vpop.f32.mrb[0].mxu0
      %v776 = vadd.f32 0.0, %v775
      %v777 = vpop.f32.mrb[0].mxu0
      %v778 = vadd.f32 0.0, %v777
      %779 = vmatprep.mubr.f32.mxu0 0.0
      %780 = vmatmul.mubr.f32.gmra.mrb[0].mxu0 %v530
      %v781 = vpop.f32.mrb[0].mxu0
      %v782 = vadd.f32 0.0, %v781
      %v783 = vpop.f32.mrb[0].mxu0
      %v784 = vadd.f32 0.0, %v783
      %785 = vmatprep.mubr.f32.mxu0 0.0
      %786 = vmatmul.mubr.f32.gmra.mrb[0].mxu0 %v533
      %v787 = vpop.f32.mrb[0].mxu0
      %v788 = vadd.f32 0.0, %v787
      %v789 = vpop.f32.mrb[0].mxu0
      %v790 = vadd.f32 0.0, %v789
      %791 = vdwg.mxu0
      %v792 = vmax.f32 %v602, %v614
      %v793 = vmax.f32 %v608, %v620
      %v794 = vmax.f32 %v792, %v626
      %v795 = vmax.f32 %v793, %v632
      %v796 = vmax.f32 %v794, %v638
      %v797 = vmax.f32 %v795, %v644
      %v798 = vmax.f32 %v796, %v650
      %v799 = vmax.f32 %v797, %v656
      %v800 = vmax.f32 %v798, %v662
      %v801 = vmax.f32 %v799, %v668
      %v802 = vmax.f32 %v800, %v674
      %v803 = vmax.f32 %v801, %v680
      %v804 = vmax.f32 %v802, %v686
      %v805 = vmax.f32 %v803, %v692
      %v806 = vmax.f32 %v804, %v698
      %v807 = vmax.f32 %v805, %v704
      %v808 = vmax.f32 %v806, %v710
      %v809 = vmax.f32 %v807, %v716
      %v810 = vmax.f32 %v808, %v722
      %v811 = vmax.f32 %v809, %v728
      %v812 = vmax.f32 %v810, %v734
      %v813 = vmax.f32 %v811, %v740
      %v814 = vmax.f32 %v812, %v746
      %v815 = vmax.f32 %v813, %v752
      %v816 = vmax.f32 %v814, %v758
      %v817 = vmax.f32 %v815, %v764
      %v818 = vmax.f32 %v816, %v770
      %v819 = vmax.f32 %v817, %v776
      %v820 = vmax.f32 %v818, %v782
      %v821 = vmax.f32 %v819, %v788
      %v822 = vmax.f32 %v820, %v821
      %v823 = vrot.slane %v822, 4
      %v824 = vmax.f32 %v822, %v823
      %v825 = vrot.slane %v824, 2
      %v826 = vmax.f32 %v824, %v825
      %v827 = vrot.slane %v826, 1
      %v828 = vmax.f32 %v826, %v827
      %v829 = vmax.f32 %v604, %v616
      %v830 = vmax.f32 %v610, %v622
      %v831 = vmax.f32 %v829, %v628
      %v832 = vmax.f32 %v830, %v634
      %v833 = vmax.f32 %v831, %v640
      %v834 = vmax.f32 %v832, %v646
      %v835 = vmax.f32 %v833, %v652
      %v836 = vmax.f32 %v834, %v658
      %v837 = vmax.f32 %v835, %v664
      %v838 = vmax.f32 %v836, %v670
      %v839 = vmax.f32 %v837, %v676
      %v840 = vmax.f32 %v838, %v682
      %v841 = vmax.f32 %v839, %v688
      %v842 = vmax.f32 %v840, %v694
      %v843 = vmax.f32 %v841, %v700
      %v844 = vmax.f32 %v842, %v706
      %v845 = vmax.f32 %v843, %v712
      %v846 = vmax.f32 %v844, %v718
      %v847 = vmax.f32 %v845, %v724
      %v848 = vmax.f32 %v846, %v730
      %v849 = vmax.f32 %v847, %v736
      %v850 = vmax.f32 %v848, %v742
      %v851 = vmax.f32 %v849, %v748
      %v852 = vmax.f32 %v850, %v754
      %v853 = vmax.f32 %v851, %v760
      %v854 = vmax.f32 %v852, %v766
      %v855 = vmax.f32 %v853, %v772
      %v856 = vmax.f32 %v854, %v778
      %v857 = vmax.f32 %v855, %v784
      %v858 = vmax.f32 %v856, %v790
      %v859 = vmax.f32 %v857, %v858
      %v860 = vrot.slane %v859, 4
      %v861 = vmax.f32 %v859, %v860
      %v862 = vrot.slane %v861, 2
      %v863 = vmax.f32 %v861, %v862
      %v864 = vrot.slane %v863, 1
      %v865 = vmax.f32 %v863, %v864
      %v866 = vsub.f32 %v602, %v828
      %v867 = vsub.f32 %v604, %v865
      %v868 = vsub.f32 %v608, %v828
      %v869 = vsub.f32 %v610, %v865
      %v870 = vsub.f32 %v614, %v828
      %v871 = vsub.f32 %v616, %v865
      %v872 = vsub.f32 %v620, %v828
      %v873 = vsub.f32 %v622, %v865
      %v874 = vsub.f32 %v626, %v828
      %v875 = vsub.f32 %v628, %v865
      %v876 = vsub.f32 %v632, %v828
      %v877 = vsub.f32 %v634, %v865
      %v878 = vsub.f32 %v638, %v828
      %v879 = vsub.f32 %v640, %v865
      %v880 = vsub.f32 %v644, %v828
      %v881 = vsub.f32 %v646, %v865
      %v882 = vsub.f32 %v650, %v828
      %v883 = vsub.f32 %v652, %v865
      %v884 = vsub.f32 %v656, %v828
      %v885 = vsub.f32 %v658, %v865
      %v886 = vsub.f32 %v662, %v828
      %v887 = vsub.f32 %v664, %v865
      %v888 = vsub.f32 %v668, %v828
      %v889 = vsub.f32 %v670, %v865
      %v890 = vsub.f32 %v674, %v828
      %v891 = vsub.f32 %v676, %v865
      %v892 = vsub.f32 %v680, %v828
      %v893 = vsub.f32 %v682, %v865
      %v894 = vsub.f32 %v686, %v828
      %v895 = vsub.f32 %v688, %v865
      %v896 = vsub.f32 %v692, %v828
      %v897 = vsub.f32 %v694, %v865
      %v898 = vsub.f32 %v698, %v828
      %v899 = vsub.f32 %v700, %v865
      %v900 = vsub.f32 %v704, %v828
      %v901 = vsub.f32 %v706, %v865
      %v902 = vsub.f32 %v710, %v828
      %v903 = vsub.f32 %v712, %v865
      %v904 = vsub.f32 %v716, %v828
      %v905 = vsub.f32 %v718, %v865
      %v906 = vsub.f32 %v722, %v828
      %v907 = vsub.f32 %v724, %v865
      %v908 = vsub.f32 %v728, %v828
      %v909 = vsub.f32 %v730, %v865
      %v910 = vsub.f32 %v734, %v828
      %v911 = vsub.f32 %v736, %v865
      %v912 = vsub.f32 %v740, %v828
      %v913 = vsub.f32 %v742, %v865
      %v914 = vsub.f32 %v746, %v828
      %v915 = vsub.f32 %v748, %v865
      %v916 = vsub.f32 %v752, %v828
      %v917 = vsub.f32 %v754, %v865
      %v918 = vsub.f32 %v758, %v828
      %v919 = vsub.f32 %v760, %v865
      %v920 = vsub.f32 %v764, %v828
      %v921 = vsub.f32 %v766, %v865
      %v922 = vsub.f32 %v770, %v828
      %v923 = vsub.f32 %v772, %v865
      %v924 = vsub.f32 %v776, %v828
      %v925 = vsub.f32 %v778, %v865
      %v926 = vsub.f32 %v782, %v828
      %v927 = vsub.f32 %v784, %v865
      %v928 = vsub.f32 %v788, %v828
      %v929 = vsub.f32 %v790, %v865
      %v930 = vmul.f32 %v866, 1.442695
      %v931 = vpow.pop %v930
      %v932 = vmul.f32 %v867, 1.442695
      %v933 = vpow.pop %v932
      %v934 = vmul.f32 %v868, 1.442695
      %v935 = vpow.pop %v934
      %v936 = vmul.f32 %v869, 1.442695
      %v937 = vpow.pop %v936
      %v938 = vmul.f32 %v870, 1.442695
      %v939 = vpow.pop %v938
      %v940 = vmul.f32 %v871, 1.442695
      %v941 = vpow.pop %v940
      %v942 = vmul.f32 %v872, 1.442695
      %v943 = vpow.pop %v942
      %v944 = vmul.f32 %v873, 1.442695
      %v945 = vpow.pop %v944
      %v946 = vmul.f32 %v874, 1.442695
      %v947 = vpow.pop %v946
      %v948 = vmul.f32 %v875, 1.442695
      %v949 = vpow.pop %v948
      %v950 = vmul.f32 %v876, 1.442695
      %v951 = vpow.pop %v950
      %v952 = vmul.f32 %v877, 1.442695
      %v953 = vpow.pop %v952
      %v954 = vmul.f32 %v878, 1.442695
      %v955 = vpow.pop %v954
      %v956 = vmul.f32 %v879, 1.442695
      %v957 = vpow.pop %v956
      %v958 = vmul.f32 %v880, 1.442695
      %v959 = vpow.pop %v958
      %v960 = vmul.f32 %v881, 1.442695
      %v961 = vpow.pop %v960
      %v962 = vmul.f32 %v882, 1.442695
      %v963 = vpow.pop %v962
      %v964 = vmul.f32 %v883, 1.442695
      %v965 = vpow.pop %v964
      %v966 = vmul.f32 %v884, 1.442695
      %v967 = vpow.pop %v966
      %v968 = vmul.f32 %v885, 1.442695
      %v969 = vpow.pop %v968
      %v970 = vmul.f32 %v886, 1.442695
      %v971 = vpow.pop %v970
      %v972 = vmul.f32 %v887, 1.442695
      %v973 = vpow.pop %v972
      %v974 = vmul.f32 %v888, 1.442695
      %v975 = vpow.pop %v974
      %v976 = vmul.f32 %v889, 1.442695
      %v977 = vpow.pop %v976
      %v978 = vmul.f32 %v890, 1.442695
      %v979 = vpow.pop %v978
      %v980 = vmul.f32 %v891, 1.442695
      %v981 = vpow.pop %v980
      %v982 = vmul.f32 %v892, 1.442695
      %v983 = vpow.pop %v982
      %v984 = vmul.f32 %v893, 1.442695
      %v985 = vpow.pop %v984
      %v986 = vmul.f32 %v894, 1.442695
      %v987 = vpow.pop %v986
      %v988 = vmul.f32 %v895, 1.442695
      %v989 = vpow.pop %v988
      %v990 = vmul.f32 %v896, 1.442695
      %v991 = vpow.pop %v990
      %v992 = vmul.f32 %v897, 1.442695
      %v993 = vpow.pop %v992
      %v994 = vmul.f32 %v898, 1.442695
      %v995 = vpow.pop %v994
      %v996 = vmul.f32 %v899, 1.442695
      %v997 = vpow.pop %v996
      %v998 = vmul.f32 %v900, 1.442695
      %v999 = vpow.pop %v998
      %v1000 = vmul.f32 %v901, 1.442695
      %v1001 = vpow.pop %v1000
      %v1002 = vmul.f32 %v902, 1.442695
      %v1003 = vpow.pop %v1002
      %v1004 = vmul.f32 %v903, 1.442695
      %v1005 = vpow.pop %v1004
      %v1006 = vmul.f32 %v904, 1.442695
      %v1007 = vpow.pop %v1006
      %v1008 = vmul.f32 %v905, 1.442695
      %v1009 = vpow.pop %v1008
      %v1010 = vmul.f32 %v906, 1.442695
      %v1011 = vpow.pop %v1010
      %v1012 = vmul.f32 %v907, 1.442695
      %v1013 = vpow.pop %v1012
      %v1014 = vmul.f32 %v908, 1.442695
      %v1015 = vpow.pop %v1014
      %v1016 = vmul.f32 %v909, 1.442695
      %v1017 = vpow.pop %v1016
      %v1018 = vmul.f32 %v910, 1.442695
      %v1019 = vpow.pop %v1018
      %v1020 = vmul.f32 %v911, 1.442695
      %v1021 = vpow.pop %v1020
      %v1022 = vmul.f32 %v912, 1.442695
      %v1023 = vpow.pop %v1022
      %v1024 = vmul.f32 %v913, 1.442695
      %v1025 = vpow.pop %v1024
      %v1026 = vmul.f32 %v914, 1.442695
      %v1027 = vpow.pop %v1026
      %v1028 = vmul.f32 %v915, 1.442695
      %v1029 = vpow.pop %v1028
      %v1030 = vmul.f32 %v916, 1.442695
      %v1031 = vpow.pop %v1030
      %v1032 = vmul.f32 %v917, 1.442695
      %v1033 = vpow.pop %v1032
      %v1034 = vmul.f32 %v918, 1.442695
      %v1035 = vpow.pop %v1034
      %v1036 = vmul.f32 %v919, 1.442695
      %v1037 = vpow.pop %v1036
      %v1038 = vmul.f32 %v920, 1.442695
      %v1039 = vpow.pop %v1038
      %v1040 = vmul.f32 %v921, 1.442695
      %v1041 = vpow.pop %v1040
      %v1042 = vmul.f32 %v922, 1.442695
      %v1043 = vpow.pop %v1042
      %v1044 = vmul.f32 %v923, 1.442695
      %v1045 = vpow.pop %v1044
      %v1046 = vmul.f32 %v924, 1.442695
      %v1047 = vpow.pop %v1046
      %v1048 = vmul.f32 %v925, 1.442695
      %v1049 = vpow.pop %v1048
      %v1050 = vmul.f32 %v926, 1.442695
      %v1051 = vpow.pop %v1050
      %v1052 = vmul.f32 %v927, 1.442695
      %v1053 = vpow.pop %v1052
      %v1054 = vmul.f32 %v928, 1.442695
      %v1055 = vpow.pop %v1054
      %v1056 = vmul.f32 %v929, 1.442695
      %v1057 = vpow.pop %v1056
      %v1058 = vpack.c.bf16 %v935, %v931
      %v1059 = vpack.c.bf16 %v937, %v933
      %v1060 = vpack.c.bf16 %v943, %v939
      %v1061 = vpack.c.bf16 %v945, %v941
      %v1062 = vpack.c.bf16 %v951, %v947
      %v1063 = vpack.c.bf16 %v953, %v949
      %v1064 = vpack.c.bf16 %v959, %v955
      %v1065 = vpack.c.bf16 %v961, %v957
      %v1066 = vpack.c.bf16 %v967, %v963
      %v1067 = vpack.c.bf16 %v969, %v965
      %v1068 = vpack.c.bf16 %v975, %v971
      %v1069 = vpack.c.bf16 %v977, %v973
      %v1070 = vpack.c.bf16 %v983, %v979
      %v1071 = vpack.c.bf16 %v985, %v981
      %v1072 = vpack.c.bf16 %v991, %v987
      %v1073 = vpack.c.bf16 %v993, %v989
      %v1074 = vpack.c.bf16 %v999, %v995
      %v1075 = vpack.c.bf16 %v1001, %v997
      %v1076 = vpack.c.bf16 %v1007, %v1003
      %v1077 = vpack.c.bf16 %v1009, %v1005
      %v1078 = vpack.c.bf16 %v1015, %v1011
      %v1079 = vpack.c.bf16 %v1017, %v1013
      %v1080 = vpack.c.bf16 %v1023, %v1019
      %v1081 = vpack.c.bf16 %v1025, %v1021
      %v1082 = vpack.c.bf16 %v1031, %v1027
      %v1083 = vpack.c.bf16 %v1033, %v1029
      %v1084 = vpack.c.bf16 %v1039, %v1035
      %v1085 = vpack.c.bf16 %v1041, %v1037
      %v1086 = vpack.c.bf16 %v1047, %v1043
      %v1087 = vpack.c.bf16 %v1049, %v1045
      %v1088 = vpack.c.bf16 %v1055, %v1051
      %v1089 = vpack.c.bf16 %v1057, %v1053
      %v1090 = vld [vmem:[#allocation4] sm:$0xff]
      %v1091 = vld [vmem:[#allocation4 + $0x8] sm:$0xff]
      %v1092 = vld [vmem:[#allocation4 + $0x10] sm:$0xff]
      %v1093 = vld [vmem:[#allocation4 + $0x18] sm:$0xff]
      %v1094 = vld [vmem:[#allocation4 + $0x20] sm:$0xff]
      %v1100 = vunpack.c.l.b16 %v1090
      %v1101 = vunpack.c.h.b16 %v1090
      %v1102 = vunpack.c.l.b16 %v1091
      %v1103 = vunpack.c.h.b16 %v1091
      %v1104 = vunpack.c.l.b16 %v1092
      %v1105 = vunpack.c.h.b16 %v1092
      %v1106 = vunpack.c.l.b16 %v1093
      %v1107 = vunpack.c.h.b16 %v1093
      %v1108 = vunpack.c.l.b16 %v1094
      %v1109 = vunpack.c.h.b16 %v1094
      %v1110 = vpack.c.b16 %v1102, %v1100
      %v1111 = vpack.c.b16 %v1103, %v1101
      %v1112 = vpack.c.b16 %v1106, %v1104
      %v1113 = vpack.c.b16 %v1107, %v1105
      %v1114 = vpack.c.b16 %v1108, %v1108
      %v1115 = vpack.c.b16 %v1109, %v1109
      %1122 = vmatprep.subr.bf16.mxu0 %v1059
      %1123 = vmatpush1.bf16.msra.mxu0 %v1058
      %1124 = vmatprep.subr.bf16.mxu0 %v1061
      %1125 = vmatpush1.bf16.msra.mxu0 %v1060
      %1126 = vmatprep.subr.bf16.mxu0 %v1063
      %1127 = vmatpush1.bf16.msra.mxu0 %v1062
      %1128 = vmatprep.subr.bf16.mxu0 %v1065
      %1129 = vmatpush1.bf16.msra.mxu0 %v1064
      %1130 = vmatprep.subr.bf16.mxu0 %v1067
      %1131 = vmatpush1.bf16.msra.mxu0 %v1066
      %1132 = vmatprep.subr.bf16.mxu0 %v1069
      %1133 = vmatpush1.bf16.msra.mxu0 %v1068
      %1134 = vmatprep.subr.bf16.mxu0 %v1071
      %1135 = vmatpush1.bf16.msra.mxu0 %v1070
      %1136 = vmatprep.subr.bf16.mxu0 %v1073
      %1137 = vmatpush1.bf16.msra.mxu0 %v1072
      %1138 = vmatprep.subr.bf16.mxu0 %v1075
      %1139 = vmatpush1.bf16.msra.mxu0 %v1074
      %1140 = vmatprep.subr.bf16.mxu0 %v1077
      %1141 = vmatpush1.bf16.msra.mxu0 %v1076
      %1142 = vmatprep.subr.bf16.mxu0 %v1079
      %1143 = vmatpush1.bf16.msra.mxu0 %v1078
      %1144 = vmatprep.subr.bf16.mxu0 %v1081
      %1145 = vmatpush1.bf16.msra.mxu0 %v1080
      %1146 = vmatprep.subr.bf16.mxu0 %v1083
      %1147 = vmatpush1.bf16.msra.mxu0 %v1082
      %1148 = vmatprep.subr.bf16.mxu0 %v1085
      %1149 = vmatpush1.bf16.msra.mxu0 %v1084
      %1150 = vmatprep.subr.bf16.mxu0 %v1087
      %1151 = vmatpush1.bf16.msra.mxu0 %v1086
      %1152 = vmatprep.subr.bf16.mxu0 %v1089
      %1153 = vmatpush1.bf16.msra.mxu0 %v1088
      %1154 = vmatprep.mubr.bf16.mxu0 %v1111
      %1155 = vmatmul.mubr.bf16.gmra.mrb[0].mxu0 %v1110
      %v1156 = vpop.f32.mrb[0].mxu0
      %v1157 = vadd.f32 0.0, %v1156
      %v1158 = vpop.f32.mrb[0].mxu0
      %v1159 = vadd.f32 0.0, %v1158
      %v1160 = vpop.f32.mrb[0].mxu0
      %v1161 = vadd.f32 0.0, %v1160
      %v1162 = vpop.f32.mrb[0].mxu0
      %v1163 = vadd.f32 0.0, %v1162
      %1164 = vmatprep.mubr.bf16.mxu0 %v1113
      %1165 = vmatmul.mubr.bf16.gmra.mrb[0].mxu0 %v1112
      %v1166 = vpop.f32.mrb[0].mxu0
      %v1167 = vadd.f32 0.0, %v1166
      %v1168 = vpop.f32.mrb[0].mxu0
      %v1169 = vadd.f32 0.0, %v1168
      %v1170 = vpop.f32.mrb[0].mxu0
      %v1171 = vadd.f32 0.0, %v1170
      %v1172 = vpop.f32.mrb[0].mxu0
      %v1173 = vadd.f32 0.0, %v1172
      %1174 = vmatprep.mubr.bf16.mxu0 %v1115
      %1175 = vmatmul.mubr.bf16.gmra.mrb[0].mxu0 %v1114
      %v1176 = vpop.f32.mrb[0].mxu0
      %v1177 = vadd.f32 0.0, %v1176
      %v1178 = vpop.f32.mrb[0].mxu0
      %v1179 = vadd.f32 0.0, %v1178
      %v1180 = vpop.f32.mrb[0].mxu0
      %v1181 = vpop.f32.mrb[0].mxu0
      %1182 = vdwg.mxu0
      %s1183 = sld [smem:[#allocation5]]
      %v1184 = vrcp.pop %v1177
      %v1185 = vrcp.pop %v1179
      %v1186 = vstv %s1183
      %v1187 = vmul.f32 %v1186, %v1184
      %v1188 = vmul.f32 %v1186, %v1185
      %s1189 = smul.addr %s366, 8
      %s1190 = scalar_lea.vmem %s184, %s1189
      %v1191 = vld [vmem:[%s1190] sm:$0xff]
      %v1192 = vld [vmem:[%s1190 + $0x8] sm:$0xff]
      %v1193 = vld [vmem:[%s1190 + $0x10] sm:$0xff]
      %v1194 = vld [vmem:[%s1190 + $0x18] sm:$0xff]
      %v1195 = vld [vmem:[%s1190 + $0x20] sm:$0xff]
      %v1196 = vld [vmem:[%s1190 + $0x28] sm:$0xff]
      %v1197 = vld [vmem:[%s1190 + $0x30] sm:$0xff]
      %v1198 = vld [vmem:[%s1190 + $0x38] sm:$0xff]
      %v1199 = vlaneseq
      %v1200 = vshrl.u32 %v1199, 7
      %v1201 = vsub.s32 0, %v1200
      %v1202 = vrot.slane %v1187, %v1201
      %v1203 = vlaneseq
      %v1204 = vshrl.u32 %v1203, 7
      %v1205 = vsub.s32 0, %v1204
      %v1206 = vrot.slane %v1188, %v1205
      %v1207 = vmul.f32 %v1157, %v1202
      %v1208 = vmul.f32 %v1159, %v1206
      %v1209 = vmul.f32 %v1161, %v1202
      %v1210 = vmul.f32 %v1163, %v1206
      %v1211 = vmul.f32 %v1167, %v1202
      %v1212 = vmul.f32 %v1169, %v1206
      %v1213 = vmul.f32 %v1171, %v1202
      %v1214 = vmul.f32 %v1173, %v1206
      %v1215 = vadd.f32 %v1207, %v1191
      %v1216 = vadd.f32 %v1208, %v1192
      %v1217 = vadd.f32 %v1209, %v1193
      %v1218 = vadd.f32 %v1210, %v1194
      %v1219 = vadd.f32 %v1211, %v1195
      %v1220 = vadd.f32 %v1212, %v1196
      %v1221 = vadd.f32 %v1213, %v1197
      %v1222 = vadd.f32 %v1214, %v1198
      %1223 = vst [vmem:[%s193] sm:$0xff] %v1215
      %1224 = vst [vmem:[%s193 + $0x8] sm:$0xff] %v1216
      %1225 = vst [vmem:[%s193 + $0x10] sm:$0xff] %v1217
      %1226 = vst [vmem:[%s193 + $0x18] sm:$0xff] %v1218
      %1227 = vst [vmem:[%s193 + $0x20] sm:$0xff] %v1219
      %1228 = vst [vmem:[%s193 + $0x28] sm:$0xff] %v1220
      %1229 = vst [vmem:[%s193 + $0x30] sm:$0xff] %v1221
      %1230 = vst [vmem:[%s193 + $0x38] sm:$0xff] %v1222
      %s1231 = smul.u32 2, %s20
      %p1232 = scmp.lt.s32.totalorder %s19, 1
      %s1233 = scalar_select %p1232, %s19, 1
      %p1234 = scmp.lt.s32.totalorder %s1231, 1
      %s1235 = scalar_select %p1234, %s1231, 1
      %s1236 = smul.addr %s1233, 8
      %s1237 = sadd.s32 %s1235, %s1236
      %s1238 = smul.addr %s1237, 8
      %s1239 = scalar_lea.vmem %s3, %s1238
      // Predicated region
      $region37: #{m3_self_attention_feature_extractor.1} parent=31 // pred_check
        %p1240 = pneg %p115
      $region38: #{m3_self_attention_feature_extractor.1} parent=31 // pred_check_branch
        %1242 = sbr.rel (%p1240) target = $region40
      $region39: #{m3_self_attention_feature_extractor.1} parent=31 // pred_region
        %s1243 = smul.u32 2, %s20
      $region40: #{m3_self_attention_feature_extractor.1} parent=31 // pred_fallthru
        _
    $region32: #{m3_self_attention_feature_extractor.1} parent=5 // pred_fallthru
      _
    %p1244 = scmp.le.s32.totalorder 2, %s10
    // Predicated region
    $region41: #{m3_self_attention_feature_extractor.1} parent=5 // pred_check
      %p1245 = pneg %p1244
    $region42: #{m3_self_attention_feature_extractor.1} parent=5 // pred_check_branch
      %1247 = sbr.rel (%p1245) target = $region44
    $region43: #{m3_self_attention_feature_extractor.1} parent=5 // pred_region
      %s1248 = ssub.s32 %s10, 2
      // Predicated region
      $region45: #{m3_self_attention_feature_extractor.1} parent=43 // pred_check
        %p1249 = pneg %p121
      $region46: #{m3_self_attention_feature_extractor.1} parent=43 // pred_check_branch
        %1251 = sbr.rel (%p1249) target = $region48
      $region47: #{m3_self_attention_feature_extractor.1} parent=43 // pred_region
        %s1252 = smul.u32 2, %s22
        %p1253 = scmp.lt.s32.totalorder %s21, 1
        %s1254 = scalar_select %p1253, %s21, 1
        %p1255 = scmp.lt.s32.totalorder %s1252, 1
        %s1256 = scalar_select %p1255, %s1252, 1
        %s1257 = smul.addr %s1254, 8
        %s1258 = sadd.s32 %s1256, %s1257
        %s1259 = smul.addr %s1258, 8
        %s1260 = scalar_lea.vmem %s3, %s1259
      $region48: #{m3_self_attention_feature_extractor.1} parent=43 // pred_fallthru
        _
    $region44: #{m3_self_attention_feature_extractor.1} parent=5 // pred_fallthru
      _
  $region6: #{m3_self_attention_feature_extractor.1} parent=0 // loop_footer
    %s14 = sadd.s32 1, %s10
  $region7: #{m3_self_attention_feature_extractor.1} parent=0 // loop_footer_branch
    %9 = sbr.rel target = $region3
  $region8: #{m3_self_attention_feature_extractor.1} parent=0 // loop_exit
    _

</llo_original>
